<compile_context>
chip_gen: v5e
topology: v5e:2x2
jax: 0.10.0
libtpu: 0.0.40
codegen_flags: <defaults>
</compile_context>

<pallas_src>
import functools

import jax
import jax.numpy as jnp
from jax import lax
from jax.experimental import pallas as pl
from jax.experimental.pallas import tpu as pltpu


def _round_up(x, m):
    return (x + m - 1) // m * m


# ------------------------------------------------------------------ kernels


def _fused_kernel(p_ref, w_ref, par_ref, o_ref, *, eps, m_valid, n_pad, cs):
    """Single-pass path (whole problem VMEM resident).

    z = W @ P is the bias-free conv output (CS, M_pad) in f32.  Exact two-pass
    batch statistics; padded M columns are all-zero in P so z == 0 there, each
    contributing exactly mz^2 to the squared-deviation sum (corrected analytically).
    """
    z = jnp.dot(w_ref[...], p_ref[...], preferred_element_type=jnp.float32)
    g = par_ref[0:cs, :]
    b = par_ref[cs:2 * cs, :]
    inv_m = 1.0 / m_valid
    mz = jnp.sum(z, axis=1, keepdims=True) * inv_m            # padded cols add 0
    d = z - mz
    var = (jnp.sum(d * d, axis=1, keepdims=True) - n_pad * mz * mz) * inv_m
    var = jnp.maximum(var, 0.0)
    scale = g * lax.rsqrt(var + eps)
    shift = b - mz * scale
    o_ref[...] = jnp.maximum(z * scale + shift, 0.0).astype(o_ref.dtype)


def _stats_kernel(p_ref, w_ref, par_ref, ss_ref, sum_ref, sq_ref, *, eps, m_valid, cs):
    """Tiled pass 1: GEMM tile + per-channel sum / sum-of-squares accumulation.

    Padded M columns of the patch matrix are all-zero, so z == 0 there and they
    contribute nothing to either accumulator (no masking / correction needed).
    On the last tile the BN affine is folded into (scale, shift).
    """
    i = pl.program_id(0)

    @pl.when(i == 0)
    def _():
        sum_ref[...] = jnp.zeros_like(sum_ref)
        sq_ref[...] = jnp.zeros_like(sq_ref)

    z = jnp.dot(w_ref[...], p_ref[...], preferred_element_type=jnp.float32)
    sum_ref[...] = sum_ref[...] + jnp.sum(z, axis=1, keepdims=True)
    sq_ref[...] = sq_ref[...] + jnp.sum(z * z, axis=1, keepdims=True)

    @pl.when(i == pl.num_programs(0) - 1)
    def _():
        inv_m = 1.0 / m_valid
        g = par_ref[0:cs, :]
        b = par_ref[cs:2 * cs, :]
        mz = sum_ref[...] * inv_m
        var = jnp.maximum(sq_ref[...] * inv_m - mz * mz, 0.0)
        scale = g * lax.rsqrt(var + eps)
        shift = b - mz * scale
        ss_ref[...] = jnp.concatenate([scale, shift], axis=0)


def _apply_kernel(p_ref, w_ref, ss_ref, o_ref, *, cs):
    """Tiled pass 2: recompute the GEMM tile, apply folded BN affine + ReLU."""
    z = jnp.dot(w_ref[...], p_ref[...], preferred_element_type=jnp.float32)
    scale = ss_ref[0:cs, :]
    shift = ss_ref[cs:2 * cs, :]
    o_ref[...] = jnp.maximum(z * scale + shift, 0.0).astype(o_ref.dtype)


# ------------------------------------------------------------------ wrapper


def conv_block_forward(x_nchw, conv_w, conv_b, bn_gamma, bn_beta, *,
                       stride=1, padding=0, eps=1e-5, tm=512, force_tiled=False):
    # conv bias cancels exactly under training-mode BatchNorm (see header note).
    del conv_b

    N, Cin, H, W = x_nchw.shape
    Cout, Cin_w, KH, KW = conv_w.shape
    assert Cin == Cin_w
    Ho = (H + 2 * padding - KH) // stride + 1
    Wo = (W + 2 * padding - KW) // stride + 1
    M = N * Ho * Wo
    K = Cin * KH * KW
    CS = _round_up(Cout, 8)          # sublane-aligned channel rows

    # ---- glue: im2col in bf16 (cast BEFORE the KH*KW-fold expansion) ----
    # TODO(synk): fold the im2col into the kernel (KH*KW accumulated (Cin x Cout)
    # matmuls over shifted input views / manual DMA) so the expanded (K, M) patch
    # matrix is never materialized in HBM.
    xb = x_nchw.astype(jnp.bfloat16)
    xp = jnp.pad(xb, ((0, 0), (0, 0), (padding, padding), (padding, padding)))
    cols = []
    for kh in range(KH):
        for kw in range(KW):
            cols.append(xp[:, :, kh:kh + (Ho - 1) * stride + 1:stride,
                               kw:kw + (Wo - 1) * stride + 1:stride])
    pat = jnp.stack(cols, axis=0)                 # (KH*KW, N, Cin, Ho, Wo)
    pat = jnp.transpose(pat, (2, 0, 1, 3, 4))     # (Cin, KH*KW, N, Ho, Wo)
    pat = pat.reshape(K, M)                       # K = (cin,kh,kw), M = (n,ho,wo)

    # weights (CS, K) and packed BN params (gamma rows then beta rows)
    w2 = jnp.pad(conv_w.reshape(Cout, K), ((0, CS - Cout), (0, 0))).astype(jnp.bfloat16)
    params = jnp.concatenate([
        jnp.pad(bn_gamma.astype(jnp.float32), (0, CS - Cout)),
        jnp.pad(bn_beta.astype(jnp.float32), (0, CS - Cout)),
    ]).reshape(2 * CS, 1)

    # ---- fast path: whole problem VMEM resident -> one fused kernel ----
    Mp = _round_up(M, 128)
    fast_bytes = K * Mp * 2 + 6 * CS * Mp * 4    # patches + a few f32 (CS, Mp) temps
    use_fast = (not force_tiled) and fast_bytes <= (16 << 20)

    if use_fast:
        patp = jnp.pad(pat, ((0, 0), (0, Mp - M)))
        out2d = pl.pallas_call(
            functools.partial(_fused_kernel, eps=eps, m_valid=M, n_pad=Mp - M, cs=CS),
            out_shape=jax.ShapeDtypeStruct((CS, Mp), jnp.float32),
            grid_spec=pltpu.PrefetchScalarGridSpec(
                num_scalar_prefetch=0,
                grid=(1,),
                in_specs=[
                    pl.BlockSpec((K, Mp), lambda i: (0, 0)),
                    pl.BlockSpec((CS, K), lambda i: (0, 0)),
                    pl.BlockSpec((2 * CS, 1), lambda i: (0, 0)),
                ],
                out_specs=pl.BlockSpec((CS, Mp), lambda i: (0, 0)),
            ),
            compiler_params=pltpu.CompilerParams(
                dimension_semantics=("arbitrary",),
                vmem_limit_bytes=int(min(max(2 * fast_bytes + (8 << 20), 24 << 20),
                                         48 << 20))),
            cost_estimate=pl.CostEstimate(
                flops=2 * CS * K * Mp + 8 * CS * Mp,
                transcendentals=CS,
                bytes_accessed=K * Mp * 2 + CS * K * 2 + 2 * CS * 4 + CS * Mp * 4),
        )(patp, w2, params)
    else:
        # ---- tiled two-pass fallback for large M ----
        tm = max(128, _round_up(tm, 128))
        M_pad = _round_up(M, tm)
        n_tiles = M_pad // tm
        patp = jnp.pad(pat, ((0, 0), (0, M_pad - M)))

        gemm_flops = 2 * CS * K * M_pad
        # double-buffered patches + output tiles, resident weights/params, headroom;
        # capped at 48 MiB so it also fits v7x's 64 MiB per-core VMEM.
        tile_bytes = 2 * (tm * K * 2) + 2 * (CS * tm * 4) + CS * 128 * 2 + 8 * CS * 4
        vmem_limit = int(min(max(4 * tile_bytes + (4 << 20), 16 << 20), 48 << 20))

        # TODO(synk): on v7x, split pass 1 over the two TensorCores (leading parallel
        # grid axis, per-core partial sums folded at finalize).
        scale_shift = pl.pallas_call(
            functools.partial(_stats_kernel, eps=eps, m_valid=M, cs=CS),
            out_shape=jax.ShapeDtypeStruct((2 * CS, 1), jnp.float32),
            grid_spec=pltpu.PrefetchScalarGridSpec(
                num_scalar_prefetch=0,
                grid=(n_tiles,),
                in_specs=[
                    pl.BlockSpec((K, tm), lambda i: (0, i)),
                    pl.BlockSpec((CS, K), lambda i: (0, 0)),
                    pl.BlockSpec((2 * CS, 1), lambda i: (0, 0)),
                ],
                out_specs=pl.BlockSpec((2 * CS, 1), lambda i: (0, 0)),
                scratch_shapes=[pltpu.VMEM((CS, 1), jnp.float32),
                                pltpu.VMEM((CS, 1), jnp.float32)],
            ),
            compiler_params=pltpu.CompilerParams(
                dimension_semantics=("arbitrary",),
                vmem_limit_bytes=vmem_limit),
            cost_estimate=pl.CostEstimate(
                flops=gemm_flops, transcendentals=CS,
                bytes_accessed=M_pad * K * 2 + CS * K * 2 + 4 * CS * 4),
        )(patp, w2, params)

        out2d = pl.pallas_call(
            functools.partial(_apply_kernel, cs=CS),
            out_shape=jax.ShapeDtypeStruct((CS, M_pad), jnp.float32),
            grid_spec=pltpu.PrefetchScalarGridSpec(
                num_scalar_prefetch=0,
                grid=(n_tiles,),
                in_specs=[
                    pl.BlockSpec((K, tm), lambda i: (0, i)),
                    pl.BlockSpec((CS, K), lambda i: (0, 0)),
                    pl.BlockSpec((2 * CS, 1), lambda i: (0, 0)),
                ],
                out_specs=pl.BlockSpec((CS, tm), lambda i: (0, i)),
            ),
            compiler_params=pltpu.CompilerParams(
                dimension_semantics=("parallel",),
                vmem_limit_bytes=vmem_limit),
            cost_estimate=pl.CostEstimate(
                flops=gemm_flops, transcendentals=0,
                bytes_accessed=M_pad * K * 2 + CS * K * 2 + 2 * CS * 4 + CS * M_pad * 4),
        )(patp, w2, scale_shift)

    out = out2d[:Cout, :M].reshape(Cout, N, Ho, Wo)   # drop channel / M padding
    return jnp.transpose(out, (1, 0, 2, 3))            # (Cout,N,Ho,Wo) -> NCHW


# ------------------------------------------------------------------ reference & test


def reference(x, w, b, gamma, beta, *, stride, padding, eps):
    y = lax.conv_general_dilated(
        x, w, (stride, stride), ((padding, padding), (padding, padding)),
        dimension_numbers=("NCHW", "OIHW", "NCHW"))
    y = y + b[None, :, None, None]
    mean = jnp.mean(y, axis=(0, 2, 3), keepdims=True)
    var = jnp.mean((y - mean) ** 2, axis=(0, 2, 3), keepdims=True)
    yh = (y - mean) / jnp.sqrt(var + eps)
    out = yh * gamma[None, :, None, None] + beta[None, :, None, None]
    return jnp.maximum(out, 0.0)


if __name__ == "__main__":
    # ConvBlock(in_channels=4, out_channels=8, kernel_size=3, stride=1, padding=1)
    N, Cin, H, W = 2, 4, 16, 16
    Cout, KH, KW = 8, 3, 3
    stride, padding, eps = 1, 1, 1e-5

    key = jax.random.PRNGKey(0)
    k1, k2, k3, k4, k5 = jax.random.split(key, 5)

    x = jax.random.normal(k1, (N, Cin, H, W), dtype=jnp.float32)

    fan_in = Cin * KH * KW
    bound = 1.0 / (fan_in ** 0.5)
    conv_w = jax.random.uniform(k2, (Cout, Cin, KH, KW), jnp.float32, -bound, bound)
    conv_b = jax.random.uniform(k3, (Cout,), jnp.float32, -bound, bound)
    bn_gamma = 1.0 + 0.1 * jax.random.normal(k4, (Cout,), jnp.float32)
    bn_beta = 0.1 * jax.random.normal(k5, (Cout,), jnp.float32)

    ref = reference(x, conv_w, conv_b, bn_gamma, bn_beta,
                    stride=stride, padding=padding, eps=eps)

    # fast (single-pass, VMEM-resident) path -- the one selected for this shape
    out = conv_block_forward(x, conv_w, conv_b, bn_gamma, bn_beta,
                             stride=stride, padding=padding, eps=eps)
    out = jax.block_until_ready(out)
    if not bool(jnp.allclose(out, ref, atol=3e-2, rtol=3e-2)):
        raise AssertionError(
            f"fast path mismatch, max abs diff = {float(jnp.max(jnp.abs(out - ref)))}")

    # tiled two-pass fallback (exercised with tm=128 so the stats accumulator runs
    # over 4 grid steps)
    out_t = conv_block_forward(x, conv_w, conv_b, bn_gamma, bn_beta,
                               stride=stride, padding=padding, eps=eps,
                               tm=128, force_tiled=True)
    out_t = jax.block_until_ready(out_t)
    if not bool(jnp.allclose(out_t, ref, atol=3e-2, rtol=3e-2)):
        raise AssertionError(
            f"tiled path mismatch, max abs diff = {float(jnp.max(jnp.abs(out_t - ref)))}")

    print("KERNEL_OK")
</pallas_src>

<mosaic_0001>
module attributes {stable_mosaic.version = 11 : i64} {
  func.func @_fused_kernel(%arg0: i32, %arg1: memref<36x512xbf16, #tpu.memory_space<vmem>>, %arg2: memref<8x36xbf16, #tpu.memory_space<vmem>>, %arg3: memref<16x1xf32, #tpu.memory_space<vmem>>, %arg4: memref<8x512xf32, #tpu.memory_space<vmem>>) attributes {dimension_semantics = [#tpu.dimension_semantics<arbitrary>], iteration_bounds = array<i64: 1>, scalar_prefetch = 0 : i64, scratch_operands = 0 : i64, tpu.core_type = #tpu.core_type<tc>, window_params = [{pipeline_mode = #tpu.pipeline_mode<synchronous>, transform_indices = @transform_0, window_bounds = array<i64: 36, 512>}, {pipeline_mode = #tpu.pipeline_mode<synchronous>, transform_indices = @transform_1, window_bounds = array<i64: 8, 36>}, {pipeline_mode = #tpu.pipeline_mode<synchronous>, transform_indices = @transform_2, window_bounds = array<i64: 16, 1>}, {pipeline_mode = #tpu.pipeline_mode<synchronous>, transform_indices = @transform_3, window_bounds = array<i64: 8, 512>}]} {
    %c0 = arith.constant 0 : index
    %c0_0 = arith.constant 0 : index
    %0 = vector.load %arg2[%c0, %c0_0] : memref<8x36xbf16, #tpu.memory_space<vmem>>, vector<8x36xbf16>
    %c0_1 = arith.constant 0 : index
    %c0_2 = arith.constant 0 : index
    %1 = vector.load %arg1[%c0_1, %c0_2] : memref<36x512xbf16, #tpu.memory_space<vmem>>, vector<36x512xbf16>
    %cst = arith.constant dense<0.000000e+00> : vector<8x512xf32>
    %2 = tpu.matmul %0, %1, %cst {dimension_numbers = #tpu.dot_dimension_numbers<[1], [0], [0], [1], [0, 0, 1, 1], [], []>} : vector<8x36xbf16>, vector<36x512xbf16>, vector<8x512xf32> -> vector<8x512xf32>
    %c0_3 = arith.constant 0 : index
    %c0_4 = arith.constant 0 : index
    %3 = vector.load %arg3[%c0_3, %c0_4] : memref<16x1xf32, #tpu.memory_space<vmem>>, vector<8x1xf32>
    %c8 = arith.constant 8 : index
    %c0_5 = arith.constant 0 : index
    %4 = vector.load %arg3[%c8, %c0_5] : memref<16x1xf32, #tpu.memory_space<vmem>>, vector<8x1xf32>
    %cst_6 = arith.constant dense<0.000000e+00> : vector<8xf32>
    %5 = vector.multi_reduction <add>, %2, %cst_6 [1] : vector<8x512xf32> to vector<8xf32>
    %6 = vector.shape_cast %5 : vector<8xf32> to vector<8x1xf32>
    %cst_7 = arith.constant 0.001953125 : f32
    %7 = vector.broadcast %cst_7 : f32 to vector<8x1xf32>
    %8 = arith.mulf %6, %7 : vector<8x1xf32>
    %9 = vector.broadcast %8 : vector<8x1xf32> to vector<8x512xf32>
    %10 = arith.subf %2, %9 : vector<8x512xf32>
    %11 = arith.mulf %10, %10 : vector<8x512xf32>
    %cst_8 = arith.constant dense<0.000000e+00> : vector<8xf32>
    %12 = vector.multi_reduction <add>, %11, %cst_8 [1] : vector<8x512xf32> to vector<8xf32>
    %13 = vector.shape_cast %12 : vector<8xf32> to vector<8x1xf32>
    %cst_9 = arith.constant 0.000000e+00 : f32
    %14 = vector.broadcast %cst_9 : f32 to vector<8x1xf32>
    %15 = arith.mulf %14, %8 : vector<8x1xf32>
    %16 = arith.mulf %15, %8 : vector<8x1xf32>
    %17 = arith.subf %13, %16 : vector<8x1xf32>
    %cst_10 = arith.constant 0.001953125 : f32
    %18 = vector.broadcast %cst_10 : f32 to vector<8x1xf32>
    %19 = arith.mulf %17, %18 : vector<8x1xf32>
    %cst_11 = arith.constant 0.000000e+00 : f32
    %20 = vector.broadcast %cst_11 : f32 to vector<8x1xf32>
    %21 = arith.maximumf %19, %20 : vector<8x1xf32>
    %cst_12 = arith.constant 9.99999974E-6 : f32
    %22 = vector.broadcast %cst_12 : f32 to vector<8x1xf32>
    %23 = arith.addf %21, %22 : vector<8x1xf32>
    %24 = math.rsqrt %23 : vector<8x1xf32>
    %25 = arith.mulf %3, %24 : vector<8x1xf32>
    %26 = arith.mulf %8, %25 : vector<8x1xf32>
    %27 = arith.subf %4, %26 : vector<8x1xf32>
    %28 = vector.broadcast %25 : vector<8x1xf32> to vector<8x512xf32>
    %29 = arith.mulf %2, %28 : vector<8x512xf32>
    %30 = vector.broadcast %27 : vector<8x1xf32> to vector<8x512xf32>
    %31 = arith.addf %29, %30 : vector<8x512xf32>
    %cst_13 = arith.constant 0.000000e+00 : f32
    %32 = vector.broadcast %cst_13 : f32 to vector<8x512xf32>
    %33 = arith.maximumf %31, %32 : vector<8x512xf32>
    %c0_14 = arith.constant 0 : index
    %c0_15 = arith.constant 0 : index
    %34 = vector.load %arg4[%c0_14, %c0_15] : memref<8x512xf32, #tpu.memory_space<vmem>>, vector<8x512xf32>
    tpu.vector_store %arg4[%c0_14, %c0_15], %33 {strides = array<i32>} : memref<8x512xf32, #tpu.memory_space<vmem>>, vector<8x512xf32>,
    return
  }
  func.func @transform_0(%arg0: i32) -> (i32, i32) {
    %c0_i32 = arith.constant 0 : i32
    %c0_i32_0 = arith.constant 0 : i32
    %c0_i32_1 = arith.constant 0 : i32
    return %c0_i32, %c0_i32_0 : i32, i32
  }
  func.func @transform_1(%arg0: i32) -> (i32, i32) {
    %c0_i32 = arith.constant 0 : i32
    %c0_i32_0 = arith.constant 0 : i32
    %c0_i32_1 = arith.constant 0 : i32
    return %c0_i32, %c0_i32_0 : i32, i32
  }
  func.func @transform_2(%arg0: i32) -> (i32, i32) {
    %c0_i32 = arith.constant 0 : i32
    %c0_i32_0 = arith.constant 0 : i32
    %c0_i32_1 = arith.constant 0 : i32
    return %c0_i32, %c0_i32_0 : i32, i32
  }
  func.func @transform_3(%arg0: i32) -> (i32, i32) {
    %c0_i32 = arith.constant 0 : i32
    %c0_i32_0 = arith.constant 0 : i32
    %c0_i32_1 = arith.constant 0 : i32
    return %c0_i32, %c0_i32_0 : i32, i32
  }
}

</mosaic_0001>

<llo_original>
// kernel: tpu_custom_call.1
$region0: #{tpu_custom_call.1}
  #allocation0 [shape = 'u32[]', space=smem, size = 0x4, offset = 0x4, fixed_abs, tag = 'smem constant byte address 0x4 - core index']
  #allocation1 [shape = 'u32[72,128]{1,0:T(1,128)}', space=vmem, size = 0x9000, scoped, tag = 'internal scratch']
  %s0 = inlined_call_operand.hbm [shape: bf16[36,512], index: 0, kind: input, shape index: {}]
  %s1 = inlined_call_operand.vmem [shape: bf16[8,36], index: 1, kind: input, shape index: {}]
  %s2 = inlined_call_operand.vmem [shape: f32[16,1], index: 2, kind: input, shape index: {}]
  %s3 = inlined_call_operand.hbm [shape: f32[8,512], index: 3, kind: output, shape index: {}]
  %s4 = sld [smem:[#allocation0]]
  $region26: #{tpu_custom_call.1} parent=0
    _
  %s6 = ssub.s32 1, %s4
  %s7 = scalar_select 0, %s6, %s4
  $region1: #{tpu_custom_call.1} parent=0
    #allocation2 [shape = 'u8[40960]{0}', space=vmem, size = 0xa000, scoped, tag = 'input window, operand 0, single buffered']
    #allocation3 [shape = 's32[1]{0}', space=sflag, size = 0x4, scoped, tag = 'scoped memory for tpu_custom_call.1']
    #allocation4 [shape = 's32[1]{0}', space=sflag, size = 0x4, scoped, tag = 'scoped memory for tpu_custom_call.1']
    #allocation5 [shape = 'u8[16384]{0}', space=vmem, size = 0x4000, scoped, tag = 'output window, operand 0, single buffered']
    %8 = vsyncpa [#allocation3], 0
    %9 = vsyncpa [#allocation4], 0
    // Predicated region
    $region2: #{tpu_custom_call.1} parent=1 // pred_check
      _
    $region3: #{tpu_custom_call.1} parent=1 // pred_check_branch
      %11 = sbr.rel (0) target = $region5
    $region4: #{tpu_custom_call.1} parent=1 // pred_region
      %13 = vsyncadd [#allocation3], 0
      %s14 = sshll.u32 %s0, 4
      %s15 = int_to_ptr.hbm [resolvable:$true] %s14
      %s16 = sshll.u32 [#allocation2], 4
      %s17 = int_to_ptr.vmem [resolvable:$true] %s16
      %22 = dma.hbm_to_vmem [thread:$0]  %s15, 1280, %s17, [#allocation3], 256, 256, 16
    $region5: #{tpu_custom_call.1} parent=1 // pred_fallthru
      _
    // Predicated region
    $region6: #{tpu_custom_call.1} parent=1 // pred_check
      _
    $region7: #{tpu_custom_call.1} parent=1 // pred_check_branch
      %24 = sbr.rel (0) target = $region9
    $region8: #{tpu_custom_call.1} parent=1 // pred_region
      _
    $region9: #{tpu_custom_call.1} parent=1 // pred_fallthru
      _
    // Predicated region
    $region10: #{tpu_custom_call.1} parent=1 // pred_check
      _
    $region11: #{tpu_custom_call.1} parent=1 // pred_check_branch
      %26 = sbr.rel (0) target = $region13
    $region12: #{tpu_custom_call.1} parent=1 // pred_region
      _
    $region13: #{tpu_custom_call.1} parent=1 // pred_fallthru
      _
    // Predicated region
    $region14: #{tpu_custom_call.1} parent=1 // pred_check
      _
    $region15: #{tpu_custom_call.1} parent=1 // pred_check_branch
      %28 = sbr.rel (0) target = $region17
    $region16: #{tpu_custom_call.1} parent=1 // pred_region
      %30 = dma.done [#allocation3], 1280
    $region17: #{tpu_custom_call.1} parent=1 // pred_fallthru
      _
    %v32 = vld [vmem:[%s1] sm:$0xf]
    %v33 = vld [vmem:[#allocation2] sm:$0xff]
    %v34 = vld [vmem:[#allocation2 + $0x8] sm:$0xff]
    %v35 = vld [vmem:[#allocation2 + $0x10] sm:$0xff]
    %v36 = vld [vmem:[#allocation2 + $0x18] sm:$0xff]
    %v37 = vld [vmem:[#allocation2 + $0x20] sm:$0xff]
    %v38 = vld [vmem:[#allocation2 + $0x28] sm:$0xff]
    %v39 = vld [vmem:[#allocation2 + $0x30] sm:$0xff]
    %v40 = vld [vmem:[#allocation2 + $0x38] sm:$0xff]
    %v41 = vld [vmem:[#allocation2 + $0x40] sm:$0x33]
    %v42 = vld [vmem:[#allocation2 + $0x48] sm:$0x33]
    %v53 = vunpack.c.l.b16 %v33
    %v54 = vunpack.c.h.b16 %v33
    %v55 = vunpack.c.l.b16 %v34
    %v56 = vunpack.c.h.b16 %v34
    %v57 = vunpack.c.l.b16 %v35
    %v58 = vunpack.c.h.b16 %v35
    %v59 = vunpack.c.l.b16 %v36
    %v60 = vunpack.c.h.b16 %v36
    %v61 = vunpack.c.l.b16 %v37
    %v62 = vunpack.c.h.b16 %v37
    %v63 = vunpack.c.l.b16 %v38
    %v64 = vunpack.c.h.b16 %v38
    %v65 = vunpack.c.l.b16 %v39
    %v66 = vunpack.c.h.b16 %v39
    %v67 = vunpack.c.l.b16 %v40
    %v68 = vunpack.c.h.b16 %v40
    %v69 = vunpack.c.l.b16 %v41
    %v70 = vunpack.c.h.b16 %v41
    %v71 = vunpack.c.l.b16 %v42
    %v72 = vunpack.c.h.b16 %v42
    %v73 = vpack.c.b16 %v57, %v53
    %v74 = vpack.c.b16 %v58, %v54
    %v75 = vpack.c.b16 %v59, %v55
    %v76 = vpack.c.b16 %v60, %v56
    %v77 = vpack.c.b16 %v65, %v61
    %v78 = vpack.c.b16 %v66, %v62
    %v79 = vpack.c.b16 %v67, %v63
    %v80 = vpack.c.b16 %v68, %v64
    %v81 = vpack.c.b16 %v69, %v69
    %v82 = vpack.c.b16 %v70, %v70
    %v83 = vpack.c.b16 %v71, %v71
    %v84 = vpack.c.b16 %v72, %v72
    %vm93 = vcmask 293888
    %v95 = vsel %vm93, %v32, 0
    %vm97 = vcmask 1041408
    %v99 = vsel %vm97, %v81, 0
    %v102 = vsel %vm97, %v82, 0
    %v105 = vsel %vm97, %v83, 0
    %v108 = vsel %vm97, %v84, 0
    %110 = vmatpush.bf16.msra.mxu0 0
    %111 = vmatpush.bf16.msra.mxu0 0
    %112 = vmatpush.bf16.msra.mxu0 0
    %113 = vmatpush.bf16.msra.mxu0 0
    %114 = vmatpush.bf16.msra.mxu0 0
    %115 = vmatpush.bf16.msra.mxu0 %v99
    %116 = vmatpush.bf16.msra.mxu0 %v77
    %117 = vmatpush.bf16.msra.mxu0 %v73
    %118 = vmatmul.bf16.gmra.mxu0 %v95
    %v119 = vpop.f32.mrf.mxu0
    %v120 = vadd.f32 0.0, %v119
    %v121 = vpop.f32.mrf.mxu0
    %122 = vdwg.mxu0
    %123 = vmatpush.bf16.msra.mxu0 0
    %124 = vmatpush.bf16.msra.mxu0 0
    %125 = vmatpush.bf16.msra.mxu0 0
    %126 = vmatpush.bf16.msra.mxu0 0
    %127 = vmatpush.bf16.msra.mxu0 0
    %128 = vmatpush.bf16.msra.mxu0 %v102
    %129 = vmatpush.bf16.msra.mxu0 %v78
    %130 = vmatpush.bf16.msra.mxu0 %v74
    %131 = vmatmul.bf16.gmra.mxu0 %v95
    %v132 = vpop.f32.mrf.mxu0
    %v133 = vadd.f32 0.0, %v132
    %v134 = vpop.f32.mrf.mxu0
    %135 = vdwg.mxu0
    %136 = vmatpush.bf16.msra.mxu0 0
    %137 = vmatpush.bf16.msra.mxu0 0
    %138 = vmatpush.bf16.msra.mxu0 0
    %139 = vmatpush.bf16.msra.mxu0 0
    %140 = vmatpush.bf16.msra.mxu0 0
    %141 = vmatpush.bf16.msra.mxu0 %v105
    %142 = vmatpush.bf16.msra.mxu0 %v79
    %143 = vmatpush.bf16.msra.mxu0 %v75
    %144 = vmatmul.bf16.gmra.mxu0 %v95
    %v145 = vpop.f32.mrf.mxu0
    %v146 = vadd.f32 0.0, %v145
    %v147 = vpop.f32.mrf.mxu0
    %148 = vdwg.mxu0
    %149 = vmatpush.bf16.msra.mxu0 0
    %150 = vmatpush.bf16.msra.mxu0 0
    %151 = vmatpush.bf16.msra.mxu0 0
    %152 = vmatpush.bf16.msra.mxu0 0
    %153 = vmatpush.bf16.msra.mxu0 0
    %154 = vmatpush.bf16.msra.mxu0 %v108
    %155 = vmatpush.bf16.msra.mxu0 %v80
    %156 = vmatpush.bf16.msra.mxu0 %v76
    %157 = vmatmul.bf16.gmra.mxu0 %v95
    %v158 = vpop.f32.mrf.mxu0
    %v159 = vadd.f32 0.0, %v158
    %v160 = vpop.f32.mrf.mxu0
    %161 = vdwg.mxu0
    %v162 = vld [vmem:[%s2] sm:$0xff]
    %v163 = vld [vmem:[%s2 + $0x8] sm:$0xff]
    %v164 = vadd.f32 %v120, %v133
    %v165 = vadd.f32 %v164, %v146
    %v166 = vadd.f32 %v165, %v159
    %167 = vadd.xlane.f32.xlu0 %v166
    %v168 = vpop.xlane.xlu0 %167
    %v169 = vmul.f32 %v168, 0.001953125
    %v170 = vsub.f32 %v120, %v169
    %v171 = vsub.f32 %v133, %v169
    %v172 = vsub.f32 %v146, %v169
    %v173 = vsub.f32 %v159, %v169
    %v174 = vmul.f32 %v170, %v170
    %v175 = vmul.f32 %v171, %v171
    %v176 = vmul.f32 %v172, %v172
    %v177 = vmul.f32 %v173, %v173
    %v178 = vadd.f32 %v174, %v175
    %v179 = vadd.f32 %v178, %v176
    %v180 = vadd.f32 %v179, %v177
    %181 = vadd.xlane.f32.xlu0 %v180
    %v182 = vpop.xlane.xlu0 %181
    %v183 = vmul.f32 %v169, 0.0
    %v184 = vmul.f32 %v183, %v169
    %v185 = vsub.f32 %v182, %v184
    %v186 = vmul.f32 %v185, 0.001953125
    %v187 = vmax.f32 %v186, 0.0
    %v188 = vadd.f32 %v187, 1e-05
    %v189 = vrsqrt.pop %v188
    %v190 = vmul.f32 %v189, %v188
    %v191 = vmul.f32 %v190, %v189
    %v192 = vmul.f32 0.5, %v191
    %v193 = vsub.f32 1.5, %v192
    %v194 = vmul.f32 %v189, %v193
    %vm195 = vweird.f32 %v188
    %vm196 = vweird.f32 %v189
    %vm197 = vmor %vm195, %vm196
    %v198 = vsel %vm197, %v189, %v194
    %v199 = vmul.f32 %v162, %v198
    %v200 = vmul.f32 %v169, %v199
    %v201 = vsub.f32 %v163, %v200
    %203 = vset.pattern.permute.xlu0 0
    %204 = vperm.xlu0 %203, %v199
    %v205 = vpop.permute.xlu0 %204
    %v207 = vmul.f32 %v120, %v205
    %v208 = vmul.f32 %v133, %v205
    %v209 = vmul.f32 %v146, %v205
    %v210 = vmul.f32 %v159, %v205
    %212 = vset.pattern.permute.xlu0 0
    %213 = vperm.xlu0 %212, %v201
    %v214 = vpop.permute.xlu0 %213
    %v216 = vadd.f32 %v207, %v214
    %v217 = vadd.f32 %v208, %v214
    %v218 = vadd.f32 %v209, %v214
    %v219 = vadd.f32 %v210, %v214
    %v220 = vmax.f32 %v216, 0.0
    %v221 = vmax.f32 %v217, 0.0
    %v222 = vmax.f32 %v218, 0.0
    %v223 = vmax.f32 %v219, 0.0
    %224 = vst [vmem:[#allocation5] sm:$0xff] %v220
    %225 = vst [vmem:[#allocation5 + $0x8] sm:$0xff] %v221
    %226 = vst [vmem:[#allocation5 + $0x10] sm:$0xff] %v222
    %227 = vst [vmem:[#allocation5 + $0x18] sm:$0xff] %v223
    // Predicated region
    $region18: #{tpu_custom_call.1} parent=1 // pred_check
      _
    $region19: #{tpu_custom_call.1} parent=1 // pred_check_branch
      %229 = sbr.rel (0) target = $region21
    $region20: #{tpu_custom_call.1} parent=1 // pred_region
      %231 = vsyncadd [#allocation4], 0
      %s233 = sshll.u32 [#allocation5], 4
      %s234 = int_to_ptr.vmem [resolvable:$true] %s233
      %s235 = sshll.u32 %s3, 4
      %s236 = int_to_ptr.hbm [resolvable:$true] %s235
      %238 = dma.vmem_to_hbm [thread:$0]  %s234, 512, %s236, [#allocation4]
    $region21: #{tpu_custom_call.1} parent=1 // pred_fallthru
      _
    // Predicated region
    $region22: #{tpu_custom_call.1} parent=1 // pred_check
      _
    $region23: #{tpu_custom_call.1} parent=1 // pred_check_branch
      %240 = sbr.rel (0) target = $region25
    $region24: #{tpu_custom_call.1} parent=1 // pred_region
      %242 = dma.done [#allocation4], 512
    $region25: #{tpu_custom_call.1} parent=1 // pred_fallthru
      _
    %243 = vsyncpa [#allocation3], 1
    %244 = vsyncpa [#allocation4], 1

</llo_original>
